<compile_context>
chip_gen: v7x
topology: tpu7x:2x2x1
jax: 0.10.0
libtpu: 0.0.40
codegen_flags: <defaults>
</compile_context>

<pallas_src>
import functools

import jax
import jax.numpy as jnp
from jax.experimental import pallas as pl
from jax.experimental.pallas import tpu as pltpu


def cha_att_kernel(hw_true, num_lane_chunks,
                   fm_ref, w1_ref, b1_ref, w2_ref, b2_ref, out_ref, acc_ref):
    # fm_ref: (B_tile, C, HW_tile)   w1_ref: (C, 16)   b1_ref: (1, 16)
    # w2_ref: (16, C)                b2_ref: (1, C)
    # out_ref: (B_tile, C)           acc_ref: (B_tile, C, 128) f32 scratch
    hw = pl.program_id(1)

    @pl.when(hw == 0)
    def _init():
        acc_ref[...] = jnp.zeros_like(acc_ref)

    # Hot loop: fold the HW tile into 128-lane chunks with plain VPU adds;
    # no cross-lane (XLU) reduce in steady state.
    tile = fm_ref[...].astype(jnp.float32)          # (B_tile, C, HW_tile)
    partial = tile[:, :, 0:128]
    for i in range(1, num_lane_chunks):
        partial = partial + tile[:, :, i * 128:(i + 1) * 128]
    acc_ref[...] += partial

    @pl.when(hw == pl.num_programs(1) - 1)
    def _finalize():
        # Global average pool (zeros from HW padding contribute nothing).
        pooled = jnp.sum(acc_ref[...], axis=-1) * (1.0 / hw_true)   # (B_tile, C)
        # Linear(64 -> 16) + ReLU
        h = jnp.dot(pooled, w1_ref[...], preferred_element_type=jnp.float32)
        h = jnp.maximum(h + b1_ref[...], 0.0)
        # Linear(16 -> 64) + Sigmoid
        o = jnp.dot(h, w2_ref[...], preferred_element_type=jnp.float32)
        out_ref[...] = jax.nn.sigmoid(o + b2_ref[...]).astype(out_ref.dtype)


def cha_att_forward(fm, w1, b1, w2, b2, *, max_hw_tile=2048):
    """fm: (B, 64, H, W) -> (B, 64, 1, 1) float32 (matches PyTorch cha_att)."""
    B, C, H, W = fm.shape
    assert C == 64, "cha_att expects 64 input channels"
    HW = H * W
    fm_flat = fm.reshape(B, C, HW)

    # HW: pad to a multiple of 128 (lane width); cap the tile at max_hw_tile.
    hw_pad = ((HW + 127) // 128) * 128
    if hw_pad > max_hw_tile:
        hw_tile = max_hw_tile
        hw_pad = ((HW + hw_tile - 1) // hw_tile) * hw_tile
    else:
        hw_tile = hw_pad

    # B: up to 8 rows per tile; pad B to a multiple of the tile if needed.
    if B <= 8:
        b_tile, b_pad = B, B
    else:
        b_tile = 8
        b_pad = ((B + 7) // 8) * 8

    if (b_pad, hw_pad) != (B, HW):
        fm_flat = jnp.pad(
            fm_flat, ((0, b_pad - B), (0, 0), (0, hw_pad - HW)))

    b1_2d = b1.reshape(1, 16)
    b2_2d = b2.reshape(1, C)

    num_lane_chunks = hw_tile // 128
    kernel = functools.partial(cha_att_kernel, float(HW), num_lane_chunks)
    grid = (b_pad // b_tile, hw_pad // hw_tile)

    out = pl.pallas_call(
        kernel,
        out_shape=jax.ShapeDtypeStruct((b_pad, C), jnp.float32),
        grid_spec=pltpu.PrefetchScalarGridSpec(
            num_scalar_prefetch=0,
            grid=grid,
            in_specs=[
                # fm: tiled over (batch, spatial); double-buffered by Pallas.
                pl.BlockSpec((b_tile, C, hw_tile), lambda b, h: (b, 0, h)),
                # weights / biases: constant index_map -> DMA'd once, resident.
                pl.BlockSpec((C, 16), lambda b, h: (0, 0)),
                pl.BlockSpec((1, 16), lambda b, h: (0, 0)),
                pl.BlockSpec((16, C), lambda b, h: (0, 0)),
                pl.BlockSpec((1, C), lambda b, h: (0, 0)),
            ],
            out_specs=pl.BlockSpec((b_tile, C), lambda b, h: (b, 0)),
            scratch_shapes=[pltpu.VMEM((b_tile, C, 128), jnp.float32)],
        ),
        compiler_params=pltpu.CompilerParams(
            dimension_semantics=("parallel", "arbitrary")),
    )(fm_flat, w1, b1_2d, w2, b2_2d)
    return out[:B].reshape(B, C, 1, 1)


def init_params(key):
    """Deterministic PyTorch-style Linear init: U(-1/sqrt(fan_in), +1/sqrt(fan_in))."""
    k1, k2, k3, k4 = jax.random.split(key, 4)
    bound1 = 1.0 / jnp.sqrt(64.0)
    bound2 = 1.0 / jnp.sqrt(16.0)
    # Stored as (in, out) so the kernel does x @ W directly
    # (PyTorch stores (out, in) and computes x @ W.T).
    w1 = jax.random.uniform(k1, (64, 16), jnp.float32, -bound1, bound1)
    b1 = jax.random.uniform(k2, (16,), jnp.float32, -bound1, bound1)
    w2 = jax.random.uniform(k3, (16, 64), jnp.float32, -bound2, bound2)
    b2 = jax.random.uniform(k4, (64,), jnp.float32, -bound2, bound2)
    return w1, b1, w2, b2


def cha_att_reference(fm, w1, b1, w2, b2):
    """Pure-JAX reference matching the PyTorch forward."""
    B = fm.shape[0]
    pooled = jnp.mean(fm, axis=(2, 3)).reshape(B, 64)
    h = jnp.maximum(pooled @ w1 + b1, 0.0)
    o = jax.nn.sigmoid(h @ w2 + b2)
    return o.reshape(B, 64, 1, 1)


if __name__ == "__main__":
    key = jax.random.PRNGKey(0)
    k_x, k_p, k_x2 = jax.random.split(key, 3)
    w1, b1, w2, b2 = init_params(k_p)

    # Primary case (aligned spatial size).
    B, C, H, W = 2, 64, 16, 16   # channels fixed at 64 by Linear(64, 16)
    fm = jax.random.normal(k_x, (B, C, H, W), jnp.float32)
    out = jax.block_until_ready(cha_att_forward(fm, w1, b1, w2, b2))
    ref = cha_att_reference(fm, w1, b1, w2, b2)
    assert out.shape == (B, 64, 1, 1), out.shape
    assert jnp.allclose(out, ref, atol=1e-5, rtol=1e-5), "mismatch vs reference (aligned)"

    # Secondary case exercising both batch and spatial padding paths.
    B2, H2, W2 = 9, 10, 10       # HW=100 -> padded to 128; B=9 -> padded to 16
    fm2 = jax.random.normal(k_x2, (B2, C, H2, W2), jnp.float32)
    out2 = jax.block_until_ready(cha_att_forward(fm2, w1, b1, w2, b2))
    ref2 = cha_att_reference(fm2, w1, b1, w2, b2)
    assert out2.shape == (B2, 64, 1, 1), out2.shape
    assert jnp.allclose(out2, ref2, atol=1e-5, rtol=1e-5), "mismatch vs reference (padded)"

    print("KERNEL_OK")
</pallas_src>

<mosaic_0001>
module attributes {stable_mosaic.version = 11 : i64} {
  func.func @cha_att_kernel(%arg0: i32, %arg1: i32, %arg2: memref<2x64x256xf32, #tpu.memory_space<vmem>>, %arg3: memref<64x16xf32, #tpu.memory_space<vmem>>, %arg4: memref<1x16xf32, #tpu.memory_space<vmem>>, %arg5: memref<16x64xf32, #tpu.memory_space<vmem>>, %arg6: memref<1x64xf32, #tpu.memory_space<vmem>>, %arg7: memref<2x64xf32, #tpu.memory_space<vmem>>, %arg8: memref<2x64x128xf32, #tpu.memory_space<vmem>>) attributes {dimension_semantics = [#tpu.dimension_semantics<parallel>, #tpu.dimension_semantics<arbitrary>], iteration_bounds = array<i64: 1, 1>, scalar_prefetch = 0 : i64, scratch_operands = 1 : i64, tpu.core_type = #tpu.core_type<tc>, window_params = [{transform_indices = @transform_0, window_bounds = array<i64: 2, 64, 256>}, {pipeline_mode = #tpu.pipeline_mode<synchronous>, transform_indices = @transform_1, window_bounds = array<i64: 64, 16>}, {pipeline_mode = #tpu.pipeline_mode<synchronous>, transform_indices = @transform_2, window_bounds = array<i64: 1, 16>}, {pipeline_mode = #tpu.pipeline_mode<synchronous>, transform_indices = @transform_3, window_bounds = array<i64: 16, 64>}, {pipeline_mode = #tpu.pipeline_mode<synchronous>, transform_indices = @transform_4, window_bounds = array<i64: 1, 64>}, {transform_indices = @transform_5, window_bounds = array<i64: 2, 64>}]} {
    %c0_i32 = arith.constant 0 : i32
    %0 = arith.cmpi eq, %arg1, %c0_i32 : i32
    %1 = arith.extui %0 : i1 to i32
    %c0_i32_0 = arith.constant 0 : i32
    %2 = arith.cmpi ne, %1, %c0_i32_0 : i32
    scf.if %2 {
      %cst = arith.constant 0.000000e+00 : f32
      %13 = vector.broadcast %cst : f32 to vector<2x64x128xf32>
      %c0_11 = arith.constant 0 : index
      %c0_12 = arith.constant 0 : index
      %c0_13 = arith.constant 0 : index
      %14 = vector.load %arg8[%c0_11, %c0_12, %c0_13] : memref<2x64x128xf32, #tpu.memory_space<vmem>>, vector<2x64x128xf32>
      tpu.vector_store %arg8[%c0_11, %c0_12, %c0_13], %13 {strides = array<i32>} : memref<2x64x128xf32, #tpu.memory_space<vmem>>, vector<2x64x128xf32>,
    } else {
    }
    %c0 = arith.constant 0 : index
    %c0_1 = arith.constant 0 : index
    %c0_2 = arith.constant 0 : index
    %3 = vector.load %arg2[%c0, %c0_1, %c0_2] : memref<2x64x256xf32, #tpu.memory_space<vmem>>, vector<2x64x256xf32>
    %4 = vector.extract_strided_slice %3 {offsets = [0, 0, 0], sizes = [2, 64, 128], strides = [1, 1, 1]} : vector<2x64x256xf32> to vector<2x64x128xf32>
    %5 = vector.extract_strided_slice %3 {offsets = [0, 0, 128], sizes = [2, 64, 128], strides = [1, 1, 1]} : vector<2x64x256xf32> to vector<2x64x128xf32>
    %6 = arith.addf %4, %5 : vector<2x64x128xf32>
    %c0_3 = arith.constant 0 : index
    %c0_4 = arith.constant 0 : index
    %c0_5 = arith.constant 0 : index
    %7 = vector.load %arg8[%c0_3, %c0_4, %c0_5] : memref<2x64x128xf32, #tpu.memory_space<vmem>>, vector<2x64x128xf32>
    %8 = arith.addf %7, %6 : vector<2x64x128xf32>
    %c0_6 = arith.constant 0 : index
    %c0_7 = arith.constant 0 : index
    %c0_8 = arith.constant 0 : index
    %9 = vector.load %arg8[%c0_6, %c0_7, %c0_8] : memref<2x64x128xf32, #tpu.memory_space<vmem>>, vector<2x64x128xf32>
    tpu.vector_store %arg8[%c0_6, %c0_7, %c0_8], %8 {strides = array<i32>} : memref<2x64x128xf32, #tpu.memory_space<vmem>>, vector<2x64x128xf32>,
    %c0_i32_9 = arith.constant 0 : i32
    %10 = arith.cmpi eq, %arg1, %c0_i32_9 : i32
    %11 = arith.extui %10 : i1 to i32
    %c0_i32_10 = arith.constant 0 : i32
    %12 = arith.cmpi ne, %11, %c0_i32_10 : i32
    scf.if %12 {
      %c0_11 = arith.constant 0 : index
      %c0_12 = arith.constant 0 : index
      %c0_13 = arith.constant 0 : index
      %13 = vector.load %arg8[%c0_11, %c0_12, %c0_13] : memref<2x64x128xf32, #tpu.memory_space<vmem>>, vector<2x64x128xf32>
      %cst = arith.constant dense<0.000000e+00> : vector<2x64xf32>
      %14 = vector.multi_reduction <add>, %13, %cst [2] : vector<2x64x128xf32> to vector<2x64xf32>
      %cst_14 = arith.constant 3.906250e-03 : f32
      %15 = vector.broadcast %cst_14 : f32 to vector<2x64xf32>
      %16 = arith.mulf %14, %15 : vector<2x64xf32>
      %c0_15 = arith.constant 0 : index
      %c0_16 = arith.constant 0 : index
      %17 = vector.load %arg3[%c0_15, %c0_16] : memref<64x16xf32, #tpu.memory_space<vmem>>, vector<64x16xf32>
      %cst_17 = arith.constant dense<0.000000e+00> : vector<2x16xf32>
      %18 = tpu.matmul %16, %17, %cst_17 {dimension_numbers = #tpu.dot_dimension_numbers<[1], [0], [0], [1], [0, 0, 1, 1], [], []>} : vector<2x64xf32>, vector<64x16xf32>, vector<2x16xf32> -> vector<2x16xf32>
      %c0_18 = arith.constant 0 : index
      %c0_19 = arith.constant 0 : index
      %19 = vector.load %arg4[%c0_18, %c0_19] : memref<1x16xf32, #tpu.memory_space<vmem>>, vector<1x16xf32>
      %20 = vector.broadcast %19 : vector<1x16xf32> to vector<2x16xf32>
      %21 = arith.addf %18, %20 : vector<2x16xf32>
      %cst_20 = arith.constant 0.000000e+00 : f32
      %22 = vector.broadcast %cst_20 : f32 to vector<2x16xf32>
      %23 = arith.maximumf %21, %22 : vector<2x16xf32>
      %c0_21 = arith.constant 0 : index
      %c0_22 = arith.constant 0 : index
      %24 = vector.load %arg5[%c0_21, %c0_22] : memref<16x64xf32, #tpu.memory_space<vmem>>, vector<16x64xf32>
      %cst_23 = arith.constant dense<0.000000e+00> : vector<2x64xf32>
      %25 = tpu.matmul %23, %24, %cst_23 {dimension_numbers = #tpu.dot_dimension_numbers<[1], [0], [0], [1], [0, 0, 1, 1], [], []>} : vector<2x16xf32>, vector<16x64xf32>, vector<2x64xf32> -> vector<2x64xf32>
      %c0_24 = arith.constant 0 : index
      %c0_25 = arith.constant 0 : index
      %26 = vector.load %arg6[%c0_24, %c0_25] : memref<1x64xf32, #tpu.memory_space<vmem>>, vector<1x64xf32>
      %27 = vector.broadcast %26 : vector<1x64xf32> to vector<2x64xf32>
      %28 = arith.addf %25, %27 : vector<2x64xf32>
      %29 = arith.negf %28 : vector<2x64xf32>
      %30 = math.exp %29 : vector<2x64xf32>
      %cst_26 = arith.constant 1.000000e+00 : f32
      %31 = vector.broadcast %cst_26 : f32 to vector<2x64xf32>
      %32 = arith.addf %31, %30 : vector<2x64xf32>
      %33 = arith.divf %31, %32 : vector<2x64xf32>
      %c0_27 = arith.constant 0 : index
      %c0_28 = arith.constant 0 : index
      %34 = vector.load %arg7[%c0_27, %c0_28] : memref<2x64xf32, #tpu.memory_space<vmem>>, vector<2x64xf32>
      tpu.vector_store %arg7[%c0_27, %c0_28], %33 {strides = array<i32>} : memref<2x64xf32, #tpu.memory_space<vmem>>, vector<2x64xf32>,
    } else {
    }
    return
  }
  func.func @transform_0(%arg0: i32, %arg1: i32) -> (i32, i32, i32) {
    %c0_i32 = arith.constant 0 : i32
    %c0_i32_0 = arith.constant 0 : i32
    return %arg0, %c0_i32, %arg1 : i32, i32, i32
  }
  func.func @transform_1(%arg0: i32, %arg1: i32) -> (i32, i32) {
    %c0_i32 = arith.constant 0 : i32
    %c0_i32_0 = arith.constant 0 : i32
    %c0_i32_1 = arith.constant 0 : i32
    return %c0_i32, %c0_i32_0 : i32, i32
  }
  func.func @transform_2(%arg0: i32, %arg1: i32) -> (i32, i32) {
    %c0_i32 = arith.constant 0 : i32
    %c0_i32_0 = arith.constant 0 : i32
    %c0_i32_1 = arith.constant 0 : i32
    return %c0_i32, %c0_i32_0 : i32, i32
  }
  func.func @transform_3(%arg0: i32, %arg1: i32) -> (i32, i32) {
    %c0_i32 = arith.constant 0 : i32
    %c0_i32_0 = arith.constant 0 : i32
    %c0_i32_1 = arith.constant 0 : i32
    return %c0_i32, %c0_i32_0 : i32, i32
  }
  func.func @transform_4(%arg0: i32, %arg1: i32) -> (i32, i32) {
    %c0_i32 = arith.constant 0 : i32
    %c0_i32_0 = arith.constant 0 : i32
    %c0_i32_1 = arith.constant 0 : i32
    return %c0_i32, %c0_i32_0 : i32, i32
  }
  func.func @transform_5(%arg0: i32, %arg1: i32) -> (i32, i32) {
    %c0_i32 = arith.constant 0 : i32
    %c0_i32_0 = arith.constant 0 : i32
    return %arg0, %c0_i32 : i32, i32
  }
}

</mosaic_0001>

<llo_original>
// kernel: tpu_custom_call.1
$region0: #{tpu_custom_call.1}
  #allocation0 [shape = 'u32[]', space=smem, size = 0x4, offset = 0x4, fixed_abs, tag = 'smem constant byte address 0x4 - core index']
  #allocation1 [shape = 'u32[144,128]{1,0:T(1,128)}', space=vmem, size = 0x12000, scoped, tag = 'internal scratch']
  #allocation2 [shape = 'f32[2,64,128]{2,1,0:T(8,128)}', space=vmem, size = 0x10000, scoped, tag = 'scratch operand']
  %s0 = inlined_call_operand.hbm [shape: f32[2,64,256], index: 0, kind: input, shape index: {}]
  %s1 = inlined_call_operand.vmem [shape: f32[64,16], index: 1, kind: input, shape index: {}]
  %s2 = inlined_call_operand.vmem [shape: f32[1,16], index: 2, kind: input, shape index: {}]
  %s3 = inlined_call_operand.vmem [shape: f32[16,64], index: 3, kind: input, shape index: {}]
  %s4 = inlined_call_operand.vmem [shape: f32[1,64], index: 4, kind: input, shape index: {}]
  %s5 = inlined_call_operand.hbm [shape: f32[2,64], index: 5, kind: output, shape index: {}]
  %s6 = sld [smem:[#allocation0]]
  $region42: #{tpu_custom_call.1} parent=0
    _
  %s8 = ssub.s32 1, %s6
  %s9 = scalar_select 0, %s8, %s6
  $region1: #{tpu_custom_call.1} parent=0
    #allocation3 [shape = 'u8[131072]{0}', space=vmem, size = 0x20000, scoped, tag = 'input window, operand 0, single buffered']
    #allocation4 [shape = 's32[1]{0}', space=sflag, size = 0x4, scoped, tag = 'scoped memory for tpu_custom_call.1']
    #allocation5 [shape = 's32[1]{0}', space=sflag, size = 0x4, scoped, tag = 'scoped memory for tpu_custom_call.1']
    #allocation6 [shape = 'u8[1024]{0}', space=vmem, size = 0x400, scoped, tag = 'output window, operand 0, single buffered']
    %10 = vsyncpa [#allocation4], 0
    %11 = vsyncpa [#allocation5], 0
    // Predicated region
    $region2: #{tpu_custom_call.1} parent=1 // pred_check
      _
    $region3: #{tpu_custom_call.1} parent=1 // pred_check_branch
      %13 = sbr.rel (0) target = $region5
    $region4: #{tpu_custom_call.1} parent=1 // pred_region
      %s15 = ssub.s32 4096, 4096
      %16 = vsyncadd [#allocation4], %s15
      %s17 = sshll.u32 [#allocation3], 4
      %s18 = int_to_ptr.vmem [resolvable:$true] %s17
      %23 = dma.hbm_to_vmem [thread:$0]  %s0, 4096, %s18, [#allocation4], 256, 256, 16
    $region5: #{tpu_custom_call.1} parent=1 // pred_fallthru
      _
    // Predicated region
    $region6: #{tpu_custom_call.1} parent=1 // pred_check
      _
    $region7: #{tpu_custom_call.1} parent=1 // pred_check_branch
      %25 = sbr.rel (0) target = $region9
    $region8: #{tpu_custom_call.1} parent=1 // pred_region
      _
    $region9: #{tpu_custom_call.1} parent=1 // pred_fallthru
      _
    // Predicated region
    $region10: #{tpu_custom_call.1} parent=1 // pred_check
      _
    $region11: #{tpu_custom_call.1} parent=1 // pred_check_branch
      %27 = sbr.rel (0) target = $region13
    $region12: #{tpu_custom_call.1} parent=1 // pred_region
      _
    $region13: #{tpu_custom_call.1} parent=1 // pred_fallthru
      _
    // Predicated region
    $region14: #{tpu_custom_call.1} parent=1 // pred_check
      _
    $region15: #{tpu_custom_call.1} parent=1 // pred_check_branch
      %29 = sbr.rel (0) target = $region17
    $region16: #{tpu_custom_call.1} parent=1 // pred_region
      _
    $region17: #{tpu_custom_call.1} parent=1 // pred_fallthru
      _
    // Predicated region
    $region18: #{tpu_custom_call.1} parent=1 // pred_check
      _
    $region19: #{tpu_custom_call.1} parent=1 // pred_check_branch
      %31 = sbr.rel (0) target = $region21
    $region20: #{tpu_custom_call.1} parent=1 // pred_region
      _
    $region21: #{tpu_custom_call.1} parent=1 // pred_fallthru
      _
    // Predicated region
    $region22: #{tpu_custom_call.1} parent=1 // pred_check
      _
    $region23: #{tpu_custom_call.1} parent=1 // pred_check_branch
      %33 = sbr.rel (0) target = $region25
    $region24: #{tpu_custom_call.1} parent=1 // pred_region
      %34 = dma.done [#allocation4], 4096
    $region25: #{tpu_custom_call.1} parent=1 // pred_fallthru
      _
    %p35 = scmp.eq.s32.totalorder 0, 0
    // Predicated region
    $region26: #{tpu_custom_call.1} parent=1 // pred_check
      %p36 = pneg %p35
    $region27: #{tpu_custom_call.1} parent=1 // pred_check_branch
      %38 = sbr.rel (%p36) target = $region29
    $region28: #{tpu_custom_call.1} parent=1 // pred_region
      %39 = vst [vmem:[#allocation2] sm:$0xff] 0.0
      %40 = vst [vmem:[#allocation2 + $0x8] sm:$0xff] 0.0
      %41 = vst [vmem:[#allocation2 + $0x10] sm:$0xff] 0.0
      %42 = vst [vmem:[#allocation2 + $0x18] sm:$0xff] 0.0
      %43 = vst [vmem:[#allocation2 + $0x20] sm:$0xff] 0.0
      %44 = vst [vmem:[#allocation2 + $0x28] sm:$0xff] 0.0
      %45 = vst [vmem:[#allocation2 + $0x30] sm:$0xff] 0.0
      %46 = vst [vmem:[#allocation2 + $0x38] sm:$0xff] 0.0
      %47 = vst [vmem:[#allocation2 + $0x40] sm:$0xff] 0.0
      %48 = vst [vmem:[#allocation2 + $0x48] sm:$0xff] 0.0
      %49 = vst [vmem:[#allocation2 + $0x50] sm:$0xff] 0.0
      %50 = vst [vmem:[#allocation2 + $0x58] sm:$0xff] 0.0
      %51 = vst [vmem:[#allocation2 + $0x60] sm:$0xff] 0.0
      %52 = vst [vmem:[#allocation2 + $0x68] sm:$0xff] 0.0
      %53 = vst [vmem:[#allocation2 + $0x70] sm:$0xff] 0.0
      %54 = vst [vmem:[#allocation2 + $0x78] sm:$0xff] 0.0
    $region29: #{tpu_custom_call.1} parent=1 // pred_fallthru
      _
    %v55 = vld [vmem:[#allocation3] sm:$0xff]
    %v56 = vld [vmem:[#allocation3 + $0x8] sm:$0xff]
    %v57 = vld [vmem:[#allocation3 + $0x10] sm:$0xff]
    %v58 = vld [vmem:[#allocation3 + $0x18] sm:$0xff]
    %v59 = vld [vmem:[#allocation3 + $0x20] sm:$0xff]
    %v60 = vld [vmem:[#allocation3 + $0x28] sm:$0xff]
    %v61 = vld [vmem:[#allocation3 + $0x30] sm:$0xff]
    %v62 = vld [vmem:[#allocation3 + $0x38] sm:$0xff]
    %v63 = vld [vmem:[#allocation3 + $0x40] sm:$0xff]
    %v64 = vld [vmem:[#allocation3 + $0x48] sm:$0xff]
    %v65 = vld [vmem:[#allocation3 + $0x50] sm:$0xff]
    %v66 = vld [vmem:[#allocation3 + $0x58] sm:$0xff]
    %v67 = vld [vmem:[#allocation3 + $0x60] sm:$0xff]
    %v68 = vld [vmem:[#allocation3 + $0x68] sm:$0xff]
    %v69 = vld [vmem:[#allocation3 + $0x70] sm:$0xff]
    %v70 = vld [vmem:[#allocation3 + $0x78] sm:$0xff]
    %v71 = vld [vmem:[#allocation3 + $0x80] sm:$0xff]
    %v72 = vld [vmem:[#allocation3 + $0x88] sm:$0xff]
    %v73 = vld [vmem:[#allocation3 + $0x90] sm:$0xff]
    %v74 = vld [vmem:[#allocation3 + $0x98] sm:$0xff]
    %v75 = vld [vmem:[#allocation3 + $0xa0] sm:$0xff]
    %v76 = vld [vmem:[#allocation3 + $0xa8] sm:$0xff]
    %v77 = vld [vmem:[#allocation3 + $0xb0] sm:$0xff]
    %v78 = vld [vmem:[#allocation3 + $0xb8] sm:$0xff]
    %v79 = vld [vmem:[#allocation3 + $0xc0] sm:$0xff]
    %v80 = vld [vmem:[#allocation3 + $0xc8] sm:$0xff]
    %v81 = vld [vmem:[#allocation3 + $0xd0] sm:$0xff]
    %v82 = vld [vmem:[#allocation3 + $0xd8] sm:$0xff]
    %v83 = vld [vmem:[#allocation3 + $0xe0] sm:$0xff]
    %v84 = vld [vmem:[#allocation3 + $0xe8] sm:$0xff]
    %v85 = vld [vmem:[#allocation3 + $0xf0] sm:$0xff]
    %v86 = vld [vmem:[#allocation3 + $0xf8] sm:$0xff]
    %v87 = vadd.f32 %v55, %v56
    %v88 = vadd.f32 %v57, %v58
    %v89 = vadd.f32 %v59, %v60
    %v90 = vadd.f32 %v61, %v62
    %v91 = vadd.f32 %v63, %v64
    %v92 = vadd.f32 %v65, %v66
    %v93 = vadd.f32 %v67, %v68
    %v94 = vadd.f32 %v69, %v70
    %v95 = vadd.f32 %v71, %v72
    %v96 = vadd.f32 %v73, %v74
    %v97 = vadd.f32 %v75, %v76
    %v98 = vadd.f32 %v77, %v78
    %v99 = vadd.f32 %v79, %v80
    %v100 = vadd.f32 %v81, %v82
    %v101 = vadd.f32 %v83, %v84
    %v102 = vadd.f32 %v85, %v86
    %v103 = vld [vmem:[#allocation2] sm:$0xff]
    %v104 = vld [vmem:[#allocation2 + $0x8] sm:$0xff]
    %v105 = vld [vmem:[#allocation2 + $0x10] sm:$0xff]
    %v106 = vld [vmem:[#allocation2 + $0x18] sm:$0xff]
    %v107 = vld [vmem:[#allocation2 + $0x20] sm:$0xff]
    %v108 = vld [vmem:[#allocation2 + $0x28] sm:$0xff]
    %v109 = vld [vmem:[#allocation2 + $0x30] sm:$0xff]
    %v110 = vld [vmem:[#allocation2 + $0x38] sm:$0xff]
    %v111 = vld [vmem:[#allocation2 + $0x40] sm:$0xff]
    %v112 = vld [vmem:[#allocation2 + $0x48] sm:$0xff]
    %v113 = vld [vmem:[#allocation2 + $0x50] sm:$0xff]
    %v114 = vld [vmem:[#allocation2 + $0x58] sm:$0xff]
    %v115 = vld [vmem:[#allocation2 + $0x60] sm:$0xff]
    %v116 = vld [vmem:[#allocation2 + $0x68] sm:$0xff]
    %v117 = vld [vmem:[#allocation2 + $0x70] sm:$0xff]
    %v118 = vld [vmem:[#allocation2 + $0x78] sm:$0xff]
    %v119 = vadd.f32 %v103, %v87
    %v120 = vadd.f32 %v104, %v88
    %v121 = vadd.f32 %v105, %v89
    %v122 = vadd.f32 %v106, %v90
    %v123 = vadd.f32 %v107, %v91
    %v124 = vadd.f32 %v108, %v92
    %v125 = vadd.f32 %v109, %v93
    %v126 = vadd.f32 %v110, %v94
    %v127 = vadd.f32 %v111, %v95
    %v128 = vadd.f32 %v112, %v96
    %v129 = vadd.f32 %v113, %v97
    %v130 = vadd.f32 %v114, %v98
    %v131 = vadd.f32 %v115, %v99
    %v132 = vadd.f32 %v116, %v100
    %v133 = vadd.f32 %v117, %v101
    %v134 = vadd.f32 %v118, %v102
    %135 = vst [vmem:[#allocation2] sm:$0xff] %v119
    %136 = vst [vmem:[#allocation2 + $0x8] sm:$0xff] %v120
    %137 = vst [vmem:[#allocation2 + $0x10] sm:$0xff] %v121
    %138 = vst [vmem:[#allocation2 + $0x18] sm:$0xff] %v122
    %139 = vst [vmem:[#allocation2 + $0x20] sm:$0xff] %v123
    %140 = vst [vmem:[#allocation2 + $0x28] sm:$0xff] %v124
    %141 = vst [vmem:[#allocation2 + $0x30] sm:$0xff] %v125
    %142 = vst [vmem:[#allocation2 + $0x38] sm:$0xff] %v126
    %143 = vst [vmem:[#allocation2 + $0x40] sm:$0xff] %v127
    %144 = vst [vmem:[#allocation2 + $0x48] sm:$0xff] %v128
    %145 = vst [vmem:[#allocation2 + $0x50] sm:$0xff] %v129
    %146 = vst [vmem:[#allocation2 + $0x58] sm:$0xff] %v130
    %147 = vst [vmem:[#allocation2 + $0x60] sm:$0xff] %v131
    %148 = vst [vmem:[#allocation2 + $0x68] sm:$0xff] %v132
    %149 = vst [vmem:[#allocation2 + $0x70] sm:$0xff] %v133
    %150 = vst [vmem:[#allocation2 + $0x78] sm:$0xff] %v134
    // Predicated region
    $region30: #{tpu_custom_call.1} parent=1 // pred_check
      %p151 = pneg %p35
    $region31: #{tpu_custom_call.1} parent=1 // pred_check_branch
      %153 = sbr.rel (%p151) target = $region33
    $region32: #{tpu_custom_call.1} parent=1 // pred_region
      %v154 = vld [vmem:[#allocation2] sm:$0xff]
      %v155 = vld [vmem:[#allocation2 + $0x8] sm:$0xff]
      %v156 = vld [vmem:[#allocation2 + $0x10] sm:$0xff]
      %v157 = vld [vmem:[#allocation2 + $0x18] sm:$0xff]
      %v158 = vld [vmem:[#allocation2 + $0x20] sm:$0xff]
      %v159 = vld [vmem:[#allocation2 + $0x28] sm:$0xff]
      %v160 = vld [vmem:[#allocation2 + $0x30] sm:$0xff]
      %v161 = vld [vmem:[#allocation2 + $0x38] sm:$0xff]
      %v162 = vld [vmem:[#allocation2 + $0x40] sm:$0xff]
      %v163 = vld [vmem:[#allocation2 + $0x48] sm:$0xff]
      %v164 = vld [vmem:[#allocation2 + $0x50] sm:$0xff]
      %v165 = vld [vmem:[#allocation2 + $0x58] sm:$0xff]
      %v166 = vld [vmem:[#allocation2 + $0x60] sm:$0xff]
      %v167 = vld [vmem:[#allocation2 + $0x68] sm:$0xff]
      %v168 = vld [vmem:[#allocation2 + $0x70] sm:$0xff]
      %v169 = vld [vmem:[#allocation2 + $0x78] sm:$0xff]
      %170 = vadd.xlane.f32.xlu0 %v154
      %v171 = vpop.xlane.xlu0 %170
      %172 = vadd.xlane.f32.xlu0 %v155
      %v173 = vpop.xlane.xlu0 %172
      %174 = vadd.xlane.f32.xlu0 %v156
      %v175 = vpop.xlane.xlu0 %174
      %176 = vadd.xlane.f32.xlu0 %v157
      %v177 = vpop.xlane.xlu0 %176
      %178 = vadd.xlane.f32.xlu0 %v158
      %v179 = vpop.xlane.xlu0 %178
      %180 = vadd.xlane.f32.xlu0 %v159
      %v181 = vpop.xlane.xlu0 %180
      %182 = vadd.xlane.f32.xlu0 %v160
      %v183 = vpop.xlane.xlu0 %182
      %184 = vadd.xlane.f32.xlu0 %v161
      %v185 = vpop.xlane.xlu0 %184
      %186 = vadd.xlane.f32.xlu0 %v162
      %v187 = vpop.xlane.xlu0 %186
      %188 = vadd.xlane.f32.xlu0 %v163
      %v189 = vpop.xlane.xlu0 %188
      %190 = vadd.xlane.f32.xlu0 %v164
      %v191 = vpop.xlane.xlu0 %190
      %192 = vadd.xlane.f32.xlu0 %v165
      %v193 = vpop.xlane.xlu0 %192
      %194 = vadd.xlane.f32.xlu0 %v166
      %v195 = vpop.xlane.xlu0 %194
      %196 = vadd.xlane.f32.xlu0 %v167
      %v197 = vpop.xlane.xlu0 %196
      %198 = vadd.xlane.f32.xlu0 %v168
      %v199 = vpop.xlane.xlu0 %198
      %200 = vadd.xlane.f32.xlu0 %v169
      %v201 = vpop.xlane.xlu0 %200
      %v202 = vmul.f32 %v171, 0.00390625
      %v203 = vmul.f32 %v173, 0.00390625
      %v204 = vmul.f32 %v175, 0.00390625
      %v205 = vmul.f32 %v177, 0.00390625
      %v206 = vmul.f32 %v179, 0.00390625
      %v207 = vmul.f32 %v181, 0.00390625
      %v208 = vmul.f32 %v183, 0.00390625
      %v209 = vmul.f32 %v185, 0.00390625
      %v210 = vmul.f32 %v187, 0.00390625
      %v211 = vmul.f32 %v189, 0.00390625
      %v212 = vmul.f32 %v191, 0.00390625
      %v213 = vmul.f32 %v193, 0.00390625
      %v214 = vmul.f32 %v195, 0.00390625
      %v215 = vmul.f32 %v197, 0.00390625
      %v216 = vmul.f32 %v199, 0.00390625
      %v217 = vmul.f32 %v201, 0.00390625
      %v218 = vld [vmem:[%s1] sm:$0xff]
      %v219 = vld [vmem:[%s1 + $0x8] sm:$0xff]
      %v220 = vld [vmem:[%s1 + $0x10] sm:$0xff]
      %v221 = vld [vmem:[%s1 + $0x18] sm:$0xff]
      %v222 = vld [vmem:[%s1 + $0x20] sm:$0xff]
      %v223 = vld [vmem:[%s1 + $0x28] sm:$0xff]
      %v224 = vld [vmem:[%s1 + $0x30] sm:$0xff]
      %v225 = vld [vmem:[%s1 + $0x38] sm:$0xff]
      %v226 = vld [vmem:[%s2] sm:$0x1]
      %v228 = vlaneseq
      %v229 = vshrl.u32 %v228, 7
      %v230 = vsub.s32 0, %v229
      %v231 = vrot.slane %v226, %v230
      %v249 = vlaneseq
      %v250 = vand.u32 %v249, 127
      %v251 = vlaneseq
      %v252 = vshrl.u32 %v251, 7
      %v253 = vsub.s32 %v250, %v252
      %v254 = vrot.slane %v202, %v253
      %v255 = vadd.s32 %v250, 4294967288
      %v256 = vlaneseq
      %v257 = vshrl.u32 %v256, 7
      %v258 = vsub.s32 %v255, %v257
      %v259 = vrot.slane %v203, %v258
      %vm260 = vcmask 130112
      %v261 = vsel %vm260, %v259, %v254
      %v262 = vadd.s32 %v250, 4294967280
      %v263 = vlaneseq
      %v264 = vshrl.u32 %v263, 7
      %v265 = vsub.s32 %v262, %v264
      %v266 = vrot.slane %v204, %v265
      %vm267 = vcmask 195712
      %v268 = vsel %vm267, %v266, %v261
      %v269 = vadd.s32 %v250, 4294967272
      %v270 = vlaneseq
      %v271 = vshrl.u32 %v270, 7
      %v272 = vsub.s32 %v269, %v271
      %v273 = vrot.slane %v205, %v272
      %vm274 = vcmask 261312
      %v275 = vsel %vm274, %v273, %v268
      %v276 = vadd.s32 %v250, 4294967264
      %v277 = vlaneseq
      %v278 = vshrl.u32 %v277, 7
      %v279 = vsub.s32 %v276, %v278
      %v280 = vrot.slane %v206, %v279
      %vm281 = vcmask 326912
      %v282 = vsel %vm281, %v280, %v275
      %v283 = vadd.s32 %v250, 4294967256
      %v284 = vlaneseq
      %v285 = vshrl.u32 %v284, 7
      %v286 = vsub.s32 %v283, %v285
      %v287 = vrot.slane %v207, %v286
      %vm288 = vcmask 392512
      %v289 = vsel %vm288, %v287, %v282
      %v290 = vadd.s32 %v250, 4294967248
      %v291 = vlaneseq
      %v292 = vshrl.u32 %v291, 7
      %v293 = vsub.s32 %v290, %v292
      %v294 = vrot.slane %v208, %v293
      %vm295 = vcmask 458112
      %v296 = vsel %vm295, %v294, %v289
      %v297 = vadd.s32 %v250, 4294967240
      %v298 = vlaneseq
      %v299 = vshrl.u32 %v298, 7
      %v300 = vsub.s32 %v297, %v299
      %v301 = vrot.slane %v209, %v300
      %vm302 = vcmask 523712
      %v303 = vsel %vm302, %v301, %v296
      %v304 = vlaneseq
      %v305 = vshrl.u32 %v304, 7
      %v306 = vsub.s32 %v250, %v305
      %v307 = vrot.slane %v210, %v306
      %v308 = vlaneseq
      %v309 = vshrl.u32 %v308, 7
      %v310 = vsub.s32 %v255, %v309
      %v311 = vrot.slane %v211, %v310
      %v312 = vsel %vm260, %v311, %v307
      %v313 = vlaneseq
      %v314 = vshrl.u32 %v313, 7
      %v315 = vsub.s32 %v262, %v314
      %v316 = vrot.slane %v212, %v315
      %v317 = vsel %vm267, %v316, %v312
      %v318 = vlaneseq
      %v319 = vshrl.u32 %v318, 7
      %v320 = vsub.s32 %v269, %v319
      %v321 = vrot.slane %v213, %v320
      %v322 = vsel %vm274, %v321, %v317
      %v323 = vlaneseq
      %v324 = vshrl.u32 %v323, 7
      %v325 = vsub.s32 %v276, %v324
      %v326 = vrot.slane %v214, %v325
      %v327 = vsel %vm281, %v326, %v322
      %v328 = vlaneseq
      %v329 = vshrl.u32 %v328, 7
      %v330 = vsub.s32 %v283, %v329
      %v331 = vrot.slane %v215, %v330
      %v332 = vsel %vm288, %v331, %v327
      %v333 = vlaneseq
      %v334 = vshrl.u32 %v333, 7
      %v335 = vsub.s32 %v290, %v334
      %v336 = vrot.slane %v216, %v335
      %v337 = vsel %vm295, %v336, %v332
      %v338 = vlaneseq
      %v339 = vshrl.u32 %v338, 7
      %v340 = vsub.s32 %v297, %v339
      %v341 = vrot.slane %v217, %v340
      %v342 = vsel %vm302, %v341, %v337
      %vm343 = vcmask 1041409
      %v344 = vsel %vm343, %v342, %v303
      %vm345 = vcmask 523264
      %v346 = vsel %vm345, %v344, 0
      %348 = vmatprep.subr.mxu0 0.0
      %349 = vmatpush1.msra.mxu0 %v218
      %350 = vmatprep.subr.mxu0 0.0
      %351 = vmatpush1.msra.mxu0 %v219
      %352 = vmatprep.subr.mxu0 0.0
      %353 = vmatpush1.msra.mxu0 %v220
      %354 = vmatprep.subr.mxu0 0.0
      %355 = vmatpush1.msra.mxu0 %v221
      %356 = vmatprep.subr.mxu0 0.0
      %357 = vmatpush1.msra.mxu0 %v222
      %358 = vmatprep.subr.mxu0 0.0
      %359 = vmatpush1.msra.mxu0 %v223
      %360 = vmatprep.subr.mxu0 0.0
      %361 = vmatpush1.msra.mxu0 %v224
      %362 = vmatprep.subr.mxu0 0.0
      %363 = vmatpush1.msra.mxu0 %v225
      %364 = vmatprep.subr.mxu0 0.0
      %365 = vmatpush1.msra.mxu0 0.0
      %366 = vmatprep.subr.mxu0 0.0
      %367 = vmatpush1.msra.mxu0 0.0
      %368 = vmatprep.subr.mxu0 0.0
      %369 = vmatpush1.msra.mxu0 0.0
      %370 = vmatprep.subr.mxu0 0.0
      %371 = vmatpush1.msra.mxu0 0.0
      %372 = vmatprep.subr.mxu0 0.0
      %373 = vmatpush1.msra.mxu0 0.0
      %374 = vmatprep.subr.mxu0 0.0
      %375 = vmatpush1.msra.mxu0 0.0
      %376 = vmatprep.subr.mxu0 0.0
      %377 = vmatpush1.msra.mxu0 0.0
      %378 = vmatprep.subr.mxu0 0.0
      %379 = vmatpush1.msra.mxu0 0.0
      %380 = vmatprep.subr.mxu0 0.0
      %381 = vmatpush1.msra.mxu0 0.0
      %382 = vmatprep.subr.mxu0 0.0
      %383 = vmatpush1.msra.mxu0 0.0
      %384 = vmatprep.subr.mxu0 0.0
      %385 = vmatpush1.msra.mxu0 0.0
      %386 = vmatprep.subr.mxu0 0.0
      %387 = vmatpush1.msra.mxu0 0.0
      %388 = vmatprep.subr.mxu0 0.0
      %389 = vmatpush1.msra.mxu0 0.0
      %390 = vmatprep.subr.mxu0 0.0
      %391 = vmatpush1.msra.mxu0 0.0
      %392 = vmatprep.subr.mxu0 0.0
      %393 = vmatpush1.msra.mxu0 0.0
      %394 = vmatprep.subr.mxu0 0.0
      %395 = vmatpush1.msra.mxu0 0.0
      %396 = vmatprep.subr.mxu0 0.0
      %397 = vmatpush1.msra.mxu0 0.0
      %398 = vmatprep.subr.mxu0 0.0
      %399 = vmatpush1.msra.mxu0 0.0
      %400 = vmatprep.subr.mxu0 0.0
      %401 = vmatpush1.msra.mxu0 0.0
      %402 = vmatprep.subr.mxu0 0.0
      %403 = vmatpush1.msra.mxu0 0.0
      %404 = vmatprep.subr.mxu0 0.0
      %405 = vmatpush1.msra.mxu0 0.0
      %406 = vmatprep.subr.mxu0 0.0
      %407 = vmatpush1.msra.mxu0 0.0
      %408 = vmatprep.subr.mxu0 0.0
      %409 = vmatpush1.msra.mxu0 0.0
      %410 = vmatprep.subr.mxu0 0.0
      %411 = vmatpush1.msra.mxu0 0.0
      %412 = vmatprep.mubr.f32.mxu0 0.0
      %413 = vmatmul.mubr.f32.gmra.mrb[0].mxu0 %v346
      %v414 = vpop.f32.mrb[0].mxu0
      %v415 = vadd.f32 %v231, %v414
      %v416 = vpop.f32.mrb[0].mxu0
      %417 = vdwg.mxu0
      %v418 = vmax.f32 %v415, 0.0
      %v419 = vld [vmem:[%s3] sm:$0xff]
      %v420 = vld [vmem:[%s3 + $0x8] sm:$0xff]
      %v421 = vld [vmem:[%s4] sm:$0x1]
      %v423 = vlaneseq
      %v424 = vshrl.u32 %v423, 7
      %v425 = vsub.s32 0, %v424
      %v426 = vrot.slane %v421, %v425
      %vm428 = vcmask 130048
      %v430 = vsel %vm428, %v418, 0
      %432 = vmatprep.subr.mxu0 0.0
      %433 = vmatpush1.msra.mxu0 %v419
      %434 = vmatprep.subr.mxu0 0.0
      %435 = vmatpush1.msra.mxu0 %v420
      %436 = vmatprep.subr.mxu0 0.0
      %437 = vmatpush1.msra.mxu0 0.0
      %438 = vmatprep.subr.mxu0 0.0
      %439 = vmatpush1.msra.mxu0 0.0
      %440 = vmatprep.subr.mxu0 0.0
      %441 = vmatpush1.msra.mxu0 0.0
      %442 = vmatprep.subr.mxu0 0.0
      %443 = vmatpush1.msra.mxu0 0.0
      %444 = vmatprep.subr.mxu0 0.0
      %445 = vmatpush1.msra.mxu0 0.0
      %446 = vmatprep.subr.mxu0 0.0
      %447 = vmatpush1.msra.mxu0 0.0
      %448 = vmatprep.subr.mxu0 0.0
      %449 = vmatpush1.msra.mxu0 0.0
      %450 = vmatprep.subr.mxu0 0.0
      %451 = vmatpush1.msra.mxu0 0.0
      %452 = vmatprep.subr.mxu0 0.0
      %453 = vmatpush1.msra.mxu0 0.0
      %454 = vmatprep.subr.mxu0 0.0
      %455 = vmatpush1.msra.mxu0 0.0
      %456 = vmatprep.subr.mxu0 0.0
      %457 = vmatpush1.msra.mxu0 0.0
      %458 = vmatprep.subr.mxu0 0.0
      %459 = vmatpush1.msra.mxu0 0.0
      %460 = vmatprep.subr.mxu0 0.0
      %461 = vmatpush1.msra.mxu0 0.0
      %462 = vmatprep.subr.mxu0 0.0
      %463 = vmatpush1.msra.mxu0 0.0
      %464 = vmatprep.subr.mxu0 0.0
      %465 = vmatpush1.msra.mxu0 0.0
      %466 = vmatprep.subr.mxu0 0.0
      %467 = vmatpush1.msra.mxu0 0.0
      %468 = vmatprep.subr.mxu0 0.0
      %469 = vmatpush1.msra.mxu0 0.0
      %470 = vmatprep.subr.mxu0 0.0
      %471 = vmatpush1.msra.mxu0 0.0
      %472 = vmatprep.subr.mxu0 0.0
      %473 = vmatpush1.msra.mxu0 0.0
      %474 = vmatprep.subr.mxu0 0.0
      %475 = vmatpush1.msra.mxu0 0.0
      %476 = vmatprep.subr.mxu0 0.0
      %477 = vmatpush1.msra.mxu0 0.0
      %478 = vmatprep.subr.mxu0 0.0
      %479 = vmatpush1.msra.mxu0 0.0
      %480 = vmatprep.subr.mxu0 0.0
      %481 = vmatpush1.msra.mxu0 0.0
      %482 = vmatprep.subr.mxu0 0.0
      %483 = vmatpush1.msra.mxu0 0.0
      %484 = vmatprep.subr.mxu0 0.0
      %485 = vmatpush1.msra.mxu0 0.0
      %486 = vmatprep.subr.mxu0 0.0
      %487 = vmatpush1.msra.mxu0 0.0
      %488 = vmatprep.subr.mxu0 0.0
      %489 = vmatpush1.msra.mxu0 0.0
      %490 = vmatprep.subr.mxu0 0.0
      %491 = vmatpush1.msra.mxu0 0.0
      %492 = vmatprep.subr.mxu0 0.0
      %493 = vmatpush1.msra.mxu0 0.0
      %494 = vmatprep.subr.mxu0 0.0
      %495 = vmatpush1.msra.mxu0 0.0
      %496 = vmatprep.mubr.f32.mxu0 0.0
      %497 = vmatmul.mubr.f32.gmra.mrb[0].mxu0 %v430
      %v498 = vpop.f32.mrb[0].mxu0
      %v499 = vadd.f32 %v426, %v498
      %v500 = vpop.f32.mrb[0].mxu0
      %501 = vdwg.mxu0
      %v502 = vxor.u32 %v499, 2147483648
      %v503 = vmul.f32 %v502, 1.442695
      %v504 = vpow.pop %v503
      %v505 = vadd.f32 %v504, 1.0
      %v506 = vrcp.pop %v505
      %v507 = vmul.f32 1.0, %v506
      %vm508 = vcmask 517120
      %509 = vst.msk [vmem:[#allocation6] sm:$0x3] %vm508, %v507
    $region33: #{tpu_custom_call.1} parent=1 // pred_fallthru
      _
    // Predicated region
    $region34: #{tpu_custom_call.1} parent=1 // pred_check
      _
    $region35: #{tpu_custom_call.1} parent=1 // pred_check_branch
      %511 = sbr.rel (0) target = $region37
    $region36: #{tpu_custom_call.1} parent=1 // pred_region
      %s513 = ssub.s32 32, 32
      %514 = vsyncadd [#allocation5], %s513
      %s516 = sshll.u32 [#allocation6], 4
      %s517 = int_to_ptr.vmem [resolvable:$true] %s516
      %519 = dma.vmem_to_hbm [thread:$0]  %s517, 32, %s5, [#allocation5]
    $region37: #{tpu_custom_call.1} parent=1 // pred_fallthru
      _
    // Predicated region
    $region38: #{tpu_custom_call.1} parent=1 // pred_check
      _
    $region39: #{tpu_custom_call.1} parent=1 // pred_check_branch
      %521 = sbr.rel (0) target = $region41
    $region40: #{tpu_custom_call.1} parent=1 // pred_region
      %522 = dma.done [#allocation5], 32
    $region41: #{tpu_custom_call.1} parent=1 // pred_fallthru
      _
    %523 = vsyncpa [#allocation4], 1
    %524 = vsyncpa [#allocation5], 1

</llo_original>
